<compile_context>
chip_gen: v7x
topology: tpu7x:2x2x1
jax: 0.10.0
libtpu: 0.0.40
codegen_flags: <defaults>
</compile_context>

<pallas_src>
import jax
import jax.numpy as jnp
from jax.experimental import pallas as pl
from jax.experimental.pallas import tpu as pltpu

NUM_LAYERS = 4          # matches the PyTorch default
BN_EPS = 1e-5
LANE = 128
BF16_SUBLANE = 16       # bf16 packs 16 rows per vreg sublane group
MAX_TILE_B = 512


def _round_up(x, m):
    return (x + m - 1) // m * m


# ----------------------------------------------------------------------------
# Kernel: relu(x @ W + b) x 4, then final linear.
# x / h / W in bf16, f32 accumulation + f32 bias/ReLU epilogue, bf16 carry.
# ----------------------------------------------------------------------------
def mlp_kernel(x_ref,
               w0_ref, b0_ref, w1_ref, b1_ref,
               w2_ref, b2_ref, w3_ref, b3_ref,
               wf_ref, bf_ref,
               o_ref):
    h = x_ref[...]                                    # (TILE_B, Din_p) bf16

    def layer(h, w_ref, b_ref):
        y = jnp.dot(h, w_ref[...],
                    preferred_element_type=jnp.float32) + b_ref[...]
        # ReLU in f32 on the VPU, carry the activation as bf16 (halves VMEM
        # traffic between layers; next dot would cast to bf16 anyway).
        return jnp.maximum(y, 0.0).astype(jnp.bfloat16)

    h = layer(h, w0_ref, b0_ref)
    h = layer(h, w1_ref, b1_ref)
    h = layer(h, w2_ref, b2_ref)
    h = layer(h, w3_ref, b3_ref)

    out = jnp.dot(h, wf_ref[...],
                  preferred_element_type=jnp.float32) + bf_ref[...]
    o_ref[...] = out.astype(o_ref.dtype)              # f32 logits


# ----------------------------------------------------------------------------
# Parameter folding: BN (inference) -> per-column scale/shift -> into W, b.
# ----------------------------------------------------------------------------
def _fold_bn(gamma, beta, mean, var):
    scale = gamma / jnp.sqrt(var + BN_EPS)
    shift = beta - mean * scale
    return scale, shift


def _fold_params(raw):
    """Return list of (W, b) in f32 with every BN folded in."""
    in_s, in_sh = _fold_bn(*raw["input_bn"])
    folded = []
    for li, (w, b, gamma, beta, mean, var) in enumerate(raw["blocks"]):
        s, sh = _fold_bn(gamma, beta, mean, var)
        if li == 0:
            # fold input BN: (x*in_s + in_sh) @ W + b == x @ (diag(in_s)@W) + (b + in_sh@W)
            b = b + in_sh @ w
            w = in_s[:, None] * w
        # fold layer BN: (x@W + b)*s + sh == x @ (W*s) + (b*s + sh)
        w = w * s[None, :]
        b = b * s + sh
        folded.append((w, b))
    folded.append((raw["wf"], raw["bf"]))
    return folded


# ----------------------------------------------------------------------------
# Generation-aware VMEM budget.
# ----------------------------------------------------------------------------
def _physical_vmem_bytes():
    try:
        return int(pltpu.get_tpu_info().vmem_capacity_bytes)
    except Exception:
        pass
    try:
        kind = jax.devices()[0].device_kind.lower()
    except Exception:
        kind = ""
    return (64 << 20) if "v7" in kind else (128 << 20)


# ----------------------------------------------------------------------------
# Wrapper: pad to lane-dense shapes, batch grid, resident bf16 weights.
# ----------------------------------------------------------------------------
@jax.jit
def mlp_forward(x, raw_params):
    batch, input_dim = x.shape
    hidden_dim = raw_params["blocks"][0][0].shape[1]
    output_dim = raw_params["wf"].shape[1]

    folded = _fold_params(raw_params)

    din_p = _round_up(input_dim, LANE)
    h_p = _round_up(hidden_dim, LANE)
    dout_p = _round_up(output_dim, LANE)

    # tile_b: bf16-sublane dense (multiple of 16); aim for >=2 grid steps so
    # the "parallel" batch axis actually feeds both TensorCores on v7x, and
    # cap at 512 so large batches amortize per-step (~0.35us) overhead.
    if batch >= 2 * MAX_TILE_B:
        tile_b = MAX_TILE_B
    else:
        tile_b = max(BF16_SUBLANE, _round_up(pl.cdiv(batch, 2), BF16_SUBLANE))
        tile_b = min(tile_b, MAX_TILE_B)
    b_pad = _round_up(batch, tile_b)
    grid = (b_pad // tile_b,)

    # x: pad + cast to bf16 in the wrapper (kernel would cast before the first
    # dot anyway) => half the HBM->VMEM DMA bytes and half the x-tile VMEM.
    x_p = jnp.pad(x.astype(jnp.bfloat16),
                  ((0, b_pad - batch), (0, din_p - input_dim)))

    dims_in = [din_p] + [h_p] * NUM_LAYERS
    dims_out = [h_p] * NUM_LAYERS + [dout_p]

    flat_args = [x_p]
    in_specs = [pl.BlockSpec((tile_b, din_p), lambda i: (i, 0))]
    for (w, b), di, do in zip(folded, dims_in, dims_out):
        w_p = jnp.pad(w, ((0, di - w.shape[0]),
                          (0, do - w.shape[1]))).astype(jnp.bfloat16)
        b_p = jnp.pad(b, ((0, do - b.shape[0]),)).astype(jnp.float32)[None, :]
        flat_args += [w_p, b_p]
        # Constant index_map => weights/bias stay resident across the batch
        # grid; Buffered(1) => single VMEM buffer instead of the default
        # double-buffer (they never change between grid steps).
        in_specs += [
            pl.BlockSpec((di, do), lambda i: (0, 0),
                         pipeline_mode=pl.Buffered(1)),
            pl.BlockSpec((1, do), lambda i: (0, 0),
                         pipeline_mode=pl.Buffered(1)),
        ]

    out_spec = pl.BlockSpec((tile_b, dout_p), lambda i: (i, 0))

    # VMEM accounting: single-buffered resident weights/biases, double-buffered
    # bf16 x tile and f32 out tile, f32+bf16 inter-layer activations, headroom.
    weight_bytes = sum(int(a.size) * a.dtype.itemsize for a in flat_args[1:])
    x_tile_bytes = 2 * tile_b * din_p * 2
    out_tile_bytes = 2 * tile_b * dout_p * 4
    act_bytes = 2 * tile_b * h_p * (4 + 2)
    phys_vmem = _physical_vmem_bytes()
    vmem_cap = min(int(phys_vmem * 0.85), phys_vmem - (8 << 20))
    vmem_limit = int(min(max(weight_bytes + x_tile_bytes + out_tile_bytes
                             + act_bytes + (16 << 20),
                             32 << 20),
                         vmem_cap))

    flops = 2 * b_pad * (din_p * h_p
                         + (NUM_LAYERS - 1) * h_p * h_p
                         + h_p * dout_p)
    bytes_accessed = (weight_bytes
                      + int(x_p.size) * 2          # bf16 input
                      + b_pad * dout_p * 4)        # f32 output

    out = pl.pallas_call(
        mlp_kernel,
        out_shape=jax.ShapeDtypeStruct((b_pad, dout_p), jnp.float32),
        grid=grid,
        in_specs=in_specs,
        out_specs=out_spec,
        compiler_params=pltpu.CompilerParams(
            dimension_semantics=("parallel",),      # megacore sharding on v7x
            vmem_limit_bytes=vmem_limit),
        cost_estimate=pl.CostEstimate(
            flops=int(flops),
            transcendentals=0,
            bytes_accessed=int(bytes_accessed)),
    )(*flat_args)

    return out[:batch, :output_dim]


# ----------------------------------------------------------------------------
# Deterministic synthetic parameters mirroring the PyTorch module's shapes.
# Linear weights are stored pre-transposed as (in_features, out_features).
# ----------------------------------------------------------------------------
def init_raw_params(key, input_dim, hidden_dim, output_dim):
    n_keys = 4 + NUM_LAYERS * 6 + 2
    ks = iter(jax.random.split(key, n_keys))

    def linear(fan_in, fan_out):
        bound = 1.0 / float(fan_in) ** 0.5
        w = jax.random.uniform(next(ks), (fan_in, fan_out), jnp.float32, -bound, bound)
        b = jax.random.uniform(next(ks), (fan_out,), jnp.float32, -bound, bound)
        return w, b

    def bn(dim):
        gamma = 1.0 + 0.1 * jax.random.normal(next(ks), (dim,), jnp.float32)
        beta = 0.1 * jax.random.normal(next(ks), (dim,), jnp.float32)
        mean = 0.1 * jax.random.normal(next(ks), (dim,), jnp.float32)
        var = jnp.abs(1.0 + 0.1 * jax.random.normal(next(ks), (dim,), jnp.float32))
        return gamma, beta, mean, var

    raw = {"input_bn": bn(input_dim), "blocks": []}
    dims_in = [input_dim] + [hidden_dim] * (NUM_LAYERS - 1)
    for li in range(NUM_LAYERS):
        w, b = linear(dims_in[li], hidden_dim)
        raw["blocks"].append((w, b) + bn(hidden_dim))
    raw["wf"], raw["bf"] = linear(hidden_dim, output_dim)
    return raw


def mlp_reference(x, raw):
    """Pure-JAX f32 reference matching the PyTorch forward (BN in eval mode)."""
    x = x.astype(jnp.float32)
    g, bb, m, v = raw["input_bn"]
    x = (x - m) / jnp.sqrt(v + BN_EPS) * g + bb
    for (w, b, gamma, beta, mean, var) in raw["blocks"]:
        y = x @ w + b
        y = (y - mean) / jnp.sqrt(var + BN_EPS) * gamma + beta
        x = jnp.maximum(y, 0.0)
    return x @ raw["wf"] + raw["bf"]


if __name__ == "__main__":
    batch, input_dim, hidden_dim, output_dim = 8, 16, 32, 8

    key = jax.random.PRNGKey(0)
    k_x, k_p = jax.random.split(key)
    x = jax.random.normal(k_x, (batch, input_dim), jnp.float32)
    raw_params = init_raw_params(k_p, input_dim, hidden_dim, output_dim)

    out = mlp_forward(x, raw_params)
    out = jax.block_until_ready(out)

    ref = mlp_reference(x, raw_params)
    assert out.shape == (batch, output_dim)
    # bf16 weights/activations => loosened tolerance vs the f32 reference
    assert jnp.allclose(out, ref, atol=5e-2, rtol=5e-2), "mismatch vs reference"

    print("KERNEL_OK")
</pallas_src>

<mosaic_0001>
module attributes {stable_mosaic.version = 11 : i64} {
  func.func @mlp_kernel(%arg0: i32, %arg1: memref<16x128xbf16, #tpu.memory_space<vmem>>, %arg2: memref<128x128xbf16, #tpu.memory_space<vmem>>, %arg3: memref<1x128xf32, #tpu.memory_space<vmem>>, %arg4: memref<128x128xbf16, #tpu.memory_space<vmem>>, %arg5: memref<1x128xf32, #tpu.memory_space<vmem>>, %arg6: memref<128x128xbf16, #tpu.memory_space<vmem>>, %arg7: memref<1x128xf32, #tpu.memory_space<vmem>>, %arg8: memref<128x128xbf16, #tpu.memory_space<vmem>>, %arg9: memref<1x128xf32, #tpu.memory_space<vmem>>, %arg10: memref<128x128xbf16, #tpu.memory_space<vmem>>, %arg11: memref<1x128xf32, #tpu.memory_space<vmem>>, %arg12: memref<16x128xf32, #tpu.memory_space<vmem>>) attributes {dimension_semantics = [#tpu.dimension_semantics<parallel>], iteration_bounds = array<i64: 1>, scalar_prefetch = 0 : i64, scratch_operands = 0 : i64, tpu.core_type = #tpu.core_type<tc>, window_params = [{transform_indices = @transform_0, window_bounds = array<i64: 16, 128>}, {pipeline_mode = #tpu.pipeline_mode<synchronous>, transform_indices = @transform_1, window_bounds = array<i64: 128, 128>}, {pipeline_mode = #tpu.pipeline_mode<synchronous>, transform_indices = @transform_2, window_bounds = array<i64: 1, 128>}, {pipeline_mode = #tpu.pipeline_mode<synchronous>, transform_indices = @transform_3, window_bounds = array<i64: 128, 128>}, {pipeline_mode = #tpu.pipeline_mode<synchronous>, transform_indices = @transform_4, window_bounds = array<i64: 1, 128>}, {pipeline_mode = #tpu.pipeline_mode<synchronous>, transform_indices = @transform_5, window_bounds = array<i64: 128, 128>}, {pipeline_mode = #tpu.pipeline_mode<synchronous>, transform_indices = @transform_6, window_bounds = array<i64: 1, 128>}, {pipeline_mode = #tpu.pipeline_mode<synchronous>, transform_indices = @transform_7, window_bounds = array<i64: 128, 128>}, {pipeline_mode = #tpu.pipeline_mode<synchronous>, transform_indices = @transform_8, window_bounds = array<i64: 1, 128>}, {pipeline_mode = #tpu.pipeline_mode<synchronous>, transform_indices = @transform_9, window_bounds = array<i64: 128, 128>}, {pipeline_mode = #tpu.pipeline_mode<synchronous>, transform_indices = @transform_10, window_bounds = array<i64: 1, 128>}, {transform_indices = @transform_11, window_bounds = array<i64: 16, 128>}]} {
    %c0 = arith.constant 0 : index
    %c0_0 = arith.constant 0 : index
    %0 = vector.load %arg1[%c0, %c0_0] : memref<16x128xbf16, #tpu.memory_space<vmem>>, vector<16x128xbf16>
    %c0_1 = arith.constant 0 : index
    %c0_2 = arith.constant 0 : index
    %1 = vector.load %arg2[%c0_1, %c0_2] : memref<128x128xbf16, #tpu.memory_space<vmem>>, vector<128x128xbf16>
    %cst = arith.constant dense<0.000000e+00> : vector<16x128xf32>
    %2 = tpu.matmul %0, %1, %cst {dimension_numbers = #tpu.dot_dimension_numbers<[1], [0], [0], [1], [0, 0, 1, 1], [], []>} : vector<16x128xbf16>, vector<128x128xbf16>, vector<16x128xf32> -> vector<16x128xf32>
    %c0_3 = arith.constant 0 : index
    %c0_4 = arith.constant 0 : index
    %3 = vector.load %arg3[%c0_3, %c0_4] : memref<1x128xf32, #tpu.memory_space<vmem>>, vector<1x128xf32>
    %4 = vector.broadcast %3 : vector<1x128xf32> to vector<16x128xf32>
    %5 = arith.addf %2, %4 : vector<16x128xf32>
    %cst_5 = arith.constant 0.000000e+00 : f32
    %6 = vector.broadcast %cst_5 : f32 to vector<16x128xf32>
    %7 = arith.maximumf %5, %6 : vector<16x128xf32>
    %8 = arith.truncf %7 : vector<16x128xf32> to vector<16x128xbf16>
    %c0_6 = arith.constant 0 : index
    %c0_7 = arith.constant 0 : index
    %9 = vector.load %arg4[%c0_6, %c0_7] : memref<128x128xbf16, #tpu.memory_space<vmem>>, vector<128x128xbf16>
    %cst_8 = arith.constant dense<0.000000e+00> : vector<16x128xf32>
    %10 = tpu.matmul %8, %9, %cst_8 {dimension_numbers = #tpu.dot_dimension_numbers<[1], [0], [0], [1], [0, 0, 1, 1], [], []>} : vector<16x128xbf16>, vector<128x128xbf16>, vector<16x128xf32> -> vector<16x128xf32>
    %c0_9 = arith.constant 0 : index
    %c0_10 = arith.constant 0 : index
    %11 = vector.load %arg5[%c0_9, %c0_10] : memref<1x128xf32, #tpu.memory_space<vmem>>, vector<1x128xf32>
    %12 = vector.broadcast %11 : vector<1x128xf32> to vector<16x128xf32>
    %13 = arith.addf %10, %12 : vector<16x128xf32>
    %cst_11 = arith.constant 0.000000e+00 : f32
    %14 = vector.broadcast %cst_11 : f32 to vector<16x128xf32>
    %15 = arith.maximumf %13, %14 : vector<16x128xf32>
    %16 = arith.truncf %15 : vector<16x128xf32> to vector<16x128xbf16>
    %c0_12 = arith.constant 0 : index
    %c0_13 = arith.constant 0 : index
    %17 = vector.load %arg6[%c0_12, %c0_13] : memref<128x128xbf16, #tpu.memory_space<vmem>>, vector<128x128xbf16>
    %cst_14 = arith.constant dense<0.000000e+00> : vector<16x128xf32>
    %18 = tpu.matmul %16, %17, %cst_14 {dimension_numbers = #tpu.dot_dimension_numbers<[1], [0], [0], [1], [0, 0, 1, 1], [], []>} : vector<16x128xbf16>, vector<128x128xbf16>, vector<16x128xf32> -> vector<16x128xf32>
    %c0_15 = arith.constant 0 : index
    %c0_16 = arith.constant 0 : index
    %19 = vector.load %arg7[%c0_15, %c0_16] : memref<1x128xf32, #tpu.memory_space<vmem>>, vector<1x128xf32>
    %20 = vector.broadcast %19 : vector<1x128xf32> to vector<16x128xf32>
    %21 = arith.addf %18, %20 : vector<16x128xf32>
    %cst_17 = arith.constant 0.000000e+00 : f32
    %22 = vector.broadcast %cst_17 : f32 to vector<16x128xf32>
    %23 = arith.maximumf %21, %22 : vector<16x128xf32>
    %24 = arith.truncf %23 : vector<16x128xf32> to vector<16x128xbf16>
    %c0_18 = arith.constant 0 : index
    %c0_19 = arith.constant 0 : index
    %25 = vector.load %arg8[%c0_18, %c0_19] : memref<128x128xbf16, #tpu.memory_space<vmem>>, vector<128x128xbf16>
    %cst_20 = arith.constant dense<0.000000e+00> : vector<16x128xf32>
    %26 = tpu.matmul %24, %25, %cst_20 {dimension_numbers = #tpu.dot_dimension_numbers<[1], [0], [0], [1], [0, 0, 1, 1], [], []>} : vector<16x128xbf16>, vector<128x128xbf16>, vector<16x128xf32> -> vector<16x128xf32>
    %c0_21 = arith.constant 0 : index
    %c0_22 = arith.constant 0 : index
    %27 = vector.load %arg9[%c0_21, %c0_22] : memref<1x128xf32, #tpu.memory_space<vmem>>, vector<1x128xf32>
    %28 = vector.broadcast %27 : vector<1x128xf32> to vector<16x128xf32>
    %29 = arith.addf %26, %28 : vector<16x128xf32>
    %cst_23 = arith.constant 0.000000e+00 : f32
    %30 = vector.broadcast %cst_23 : f32 to vector<16x128xf32>
    %31 = arith.maximumf %29, %30 : vector<16x128xf32>
    %32 = arith.truncf %31 : vector<16x128xf32> to vector<16x128xbf16>
    %c0_24 = arith.constant 0 : index
    %c0_25 = arith.constant 0 : index
    %33 = vector.load %arg10[%c0_24, %c0_25] : memref<128x128xbf16, #tpu.memory_space<vmem>>, vector<128x128xbf16>
    %cst_26 = arith.constant dense<0.000000e+00> : vector<16x128xf32>
    %34 = tpu.matmul %32, %33, %cst_26 {dimension_numbers = #tpu.dot_dimension_numbers<[1], [0], [0], [1], [0, 0, 1, 1], [], []>} : vector<16x128xbf16>, vector<128x128xbf16>, vector<16x128xf32> -> vector<16x128xf32>
    %c0_27 = arith.constant 0 : index
    %c0_28 = arith.constant 0 : index
    %35 = vector.load %arg11[%c0_27, %c0_28] : memref<1x128xf32, #tpu.memory_space<vmem>>, vector<1x128xf32>
    %36 = vector.broadcast %35 : vector<1x128xf32> to vector<16x128xf32>
    %37 = arith.addf %34, %36 : vector<16x128xf32>
    %c0_29 = arith.constant 0 : index
    %c0_30 = arith.constant 0 : index
    %38 = vector.load %arg12[%c0_29, %c0_30] : memref<16x128xf32, #tpu.memory_space<vmem>>, vector<16x128xf32>
    tpu.vector_store %arg12[%c0_29, %c0_30], %37 {strides = array<i32>} : memref<16x128xf32, #tpu.memory_space<vmem>>, vector<16x128xf32>,
    return
  }
  func.func @transform_0(%arg0: i32) -> (i32, i32) {
    %c0_i32 = arith.constant 0 : i32
    %c0_i32_0 = arith.constant 0 : i32
    return %arg0, %c0_i32 : i32, i32
  }
  func.func @transform_1(%arg0: i32) -> (i32, i32) {
    %c0_i32 = arith.constant 0 : i32
    %c0_i32_0 = arith.constant 0 : i32
    %c0_i32_1 = arith.constant 0 : i32
    return %c0_i32, %c0_i32_0 : i32, i32
  }
  func.func @transform_2(%arg0: i32) -> (i32, i32) {
    %c0_i32 = arith.constant 0 : i32
    %c0_i32_0 = arith.constant 0 : i32
    %c0_i32_1 = arith.constant 0 : i32
    return %c0_i32, %c0_i32_0 : i32, i32
  }
  func.func @transform_3(%arg0: i32) -> (i32, i32) {
    %c0_i32 = arith.constant 0 : i32
    %c0_i32_0 = arith.constant 0 : i32
    %c0_i32_1 = arith.constant 0 : i32
    return %c0_i32, %c0_i32_0 : i32, i32
  }
  func.func @transform_4(%arg0: i32) -> (i32, i32) {
    %c0_i32 = arith.constant 0 : i32
    %c0_i32_0 = arith.constant 0 : i32
    %c0_i32_1 = arith.constant 0 : i32
    return %c0_i32, %c0_i32_0 : i32, i32
  }
  func.func @transform_5(%arg0: i32) -> (i32, i32) {
    %c0_i32 = arith.constant 0 : i32
    %c0_i32_0 = arith.constant 0 : i32
    %c0_i32_1 = arith.constant 0 : i32
    return %c0_i32, %c0_i32_0 : i32, i32
  }
  func.func @transform_6(%arg0: i32) -> (i32, i32) {
    %c0_i32 = arith.constant 0 : i32
    %c0_i32_0 = arith.constant 0 : i32
    %c0_i32_1 = arith.constant 0 : i32
    return %c0_i32, %c0_i32_0 : i32, i32
  }
  func.func @transform_7(%arg0: i32) -> (i32, i32) {
    %c0_i32 = arith.constant 0 : i32
    %c0_i32_0 = arith.constant 0 : i32
    %c0_i32_1 = arith.constant 0 : i32
    return %c0_i32, %c0_i32_0 : i32, i32
  }
  func.func @transform_8(%arg0: i32) -> (i32, i32) {
    %c0_i32 = arith.constant 0 : i32
    %c0_i32_0 = arith.constant 0 : i32
    %c0_i32_1 = arith.constant 0 : i32
    return %c0_i32, %c0_i32_0 : i32, i32
  }
  func.func @transform_9(%arg0: i32) -> (i32, i32) {
    %c0_i32 = arith.constant 0 : i32
    %c0_i32_0 = arith.constant 0 : i32
    %c0_i32_1 = arith.constant 0 : i32
    return %c0_i32, %c0_i32_0 : i32, i32
  }
  func.func @transform_10(%arg0: i32) -> (i32, i32) {
    %c0_i32 = arith.constant 0 : i32
    %c0_i32_0 = arith.constant 0 : i32
    %c0_i32_1 = arith.constant 0 : i32
    return %c0_i32, %c0_i32_0 : i32, i32
  }
  func.func @transform_11(%arg0: i32) -> (i32, i32) {
    %c0_i32 = arith.constant 0 : i32
    %c0_i32_0 = arith.constant 0 : i32
    return %arg0, %c0_i32 : i32, i32
  }
}

</mosaic_0001>

<llo_original>
// kernel: mlp_forward.1
$region0: #{mlp_forward.1}
  #allocation0 [shape = 'u32[]', space=smem, size = 0x4, offset = 0x4, fixed_abs, tag = 'smem constant byte address 0x4 - core index']
  #allocation1 [shape = 'u32[144,128]{1,0:T(1,128)}', space=vmem, size = 0x12000, scoped, tag = 'internal scratch']
  %s0 = inlined_call_operand.vmem [shape: bf16[16,128], index: 0, kind: input, shape index: {}]
  %s1 = inlined_call_operand.vmem [shape: bf16[128,128], index: 1, kind: input, shape index: {}]
  %s2 = inlined_call_operand.vmem [shape: f32[1,128], index: 2, kind: input, shape index: {}]
  %s3 = inlined_call_operand.vmem [shape: bf16[128,128], index: 3, kind: input, shape index: {}]
  %s4 = inlined_call_operand.vmem [shape: f32[1,128], index: 4, kind: input, shape index: {}]
  %s5 = inlined_call_operand.vmem [shape: bf16[128,128], index: 5, kind: input, shape index: {}]
  %s6 = inlined_call_operand.vmem [shape: f32[1,128], index: 6, kind: input, shape index: {}]
  %s7 = inlined_call_operand.vmem [shape: bf16[128,128], index: 7, kind: input, shape index: {}]
  %s8 = inlined_call_operand.vmem [shape: f32[1,128], index: 8, kind: input, shape index: {}]
  %s9 = inlined_call_operand.vmem [shape: bf16[128,128], index: 9, kind: input, shape index: {}]
  %s10 = inlined_call_operand.vmem [shape: f32[1,128], index: 10, kind: input, shape index: {}]
  %s11 = inlined_call_operand.vmem [shape: f32[16,128], index: 11, kind: output, shape index: {}]
  %s12 = sld [smem:[#allocation0]]
  $region54: #{mlp_forward.1} parent=0
    _
  %s14 = ssub.s32 1, %s12
  %s15 = scalar_select 0, %s14, %s12
  // Predicated region
  $region2: #{mlp_forward.1} parent=0 // pred_check
    _
  $region3: #{mlp_forward.1} parent=0 // pred_check_branch
    %17 = sbr.rel (0) target = $region5
  $region4: #{mlp_forward.1} parent=0 // pred_region
    _
  $region5: #{mlp_forward.1} parent=0 // pred_fallthru
    _
  // Predicated region
  $region6: #{mlp_forward.1} parent=0 // pred_check
    _
  $region7: #{mlp_forward.1} parent=0 // pred_check_branch
    %19 = sbr.rel (0) target = $region9
  $region8: #{mlp_forward.1} parent=0 // pred_region
    _
  $region9: #{mlp_forward.1} parent=0 // pred_fallthru
    _
  // Predicated region
  $region10: #{mlp_forward.1} parent=0 // pred_check
    _
  $region11: #{mlp_forward.1} parent=0 // pred_check_branch
    %21 = sbr.rel (0) target = $region13
  $region12: #{mlp_forward.1} parent=0 // pred_region
    _
  $region13: #{mlp_forward.1} parent=0 // pred_fallthru
    _
  // Predicated region
  $region14: #{mlp_forward.1} parent=0 // pred_check
    _
  $region15: #{mlp_forward.1} parent=0 // pred_check_branch
    %23 = sbr.rel (0) target = $region17
  $region16: #{mlp_forward.1} parent=0 // pred_region
    _
  $region17: #{mlp_forward.1} parent=0 // pred_fallthru
    _
  // Predicated region
  $region18: #{mlp_forward.1} parent=0 // pred_check
    _
  $region19: #{mlp_forward.1} parent=0 // pred_check_branch
    %25 = sbr.rel (0) target = $region21
  $region20: #{mlp_forward.1} parent=0 // pred_region
    _
  $region21: #{mlp_forward.1} parent=0 // pred_fallthru
    _
  // Predicated region
  $region22: #{mlp_forward.1} parent=0 // pred_check
    _
  $region23: #{mlp_forward.1} parent=0 // pred_check_branch
    %27 = sbr.rel (0) target = $region25
  $region24: #{mlp_forward.1} parent=0 // pred_region
    _
  $region25: #{mlp_forward.1} parent=0 // pred_fallthru
    _
  // Predicated region
  $region26: #{mlp_forward.1} parent=0 // pred_check
    _
  $region27: #{mlp_forward.1} parent=0 // pred_check_branch
    %29 = sbr.rel (0) target = $region29
  $region28: #{mlp_forward.1} parent=0 // pred_region
    _
  $region29: #{mlp_forward.1} parent=0 // pred_fallthru
    _
  // Predicated region
  $region30: #{mlp_forward.1} parent=0 // pred_check
    _
  $region31: #{mlp_forward.1} parent=0 // pred_check_branch
    %31 = sbr.rel (0) target = $region33
  $region32: #{mlp_forward.1} parent=0 // pred_region
    _
  $region33: #{mlp_forward.1} parent=0 // pred_fallthru
    _
  // Predicated region
  $region34: #{mlp_forward.1} parent=0 // pred_check
    _
  $region35: #{mlp_forward.1} parent=0 // pred_check_branch
    %33 = sbr.rel (0) target = $region37
  $region36: #{mlp_forward.1} parent=0 // pred_region
    _
  $region37: #{mlp_forward.1} parent=0 // pred_fallthru
    _
  // Predicated region
  $region38: #{mlp_forward.1} parent=0 // pred_check
    _
  $region39: #{mlp_forward.1} parent=0 // pred_check_branch
    %35 = sbr.rel (0) target = $region41
  $region40: #{mlp_forward.1} parent=0 // pred_region
    _
  $region41: #{mlp_forward.1} parent=0 // pred_fallthru
    _
  // Predicated region
  $region42: #{mlp_forward.1} parent=0 // pred_check
    _
  $region43: #{mlp_forward.1} parent=0 // pred_check_branch
    %37 = sbr.rel (0) target = $region45
  $region44: #{mlp_forward.1} parent=0 // pred_region
    _
  $region45: #{mlp_forward.1} parent=0 // pred_fallthru
    _
  %v39 = vld [vmem:[%s0] sm:$0xf]
  %v40 = vld [vmem:[%s0 + $0x4] sm:$0xf]
  %v41 = vld [vmem:[%s1] sm:$0xf]
  %v42 = vld [vmem:[%s1 + $0x4] sm:$0xf]
  %v43 = vld [vmem:[%s1 + $0x8] sm:$0xf]
  %v44 = vld [vmem:[%s1 + $0xc] sm:$0xf]
  %v45 = vld [vmem:[%s1 + $0x10] sm:$0xf]
  %v46 = vld [vmem:[%s1 + $0x14] sm:$0xf]
  %v47 = vld [vmem:[%s1 + $0x18] sm:$0xf]
  %v48 = vld [vmem:[%s1 + $0x1c] sm:$0xf]
  %v49 = vld [vmem:[%s1 + $0x20] sm:$0xf]
  %v50 = vld [vmem:[%s1 + $0x24] sm:$0xf]
  %v51 = vld [vmem:[%s1 + $0x28] sm:$0xf]
  %v52 = vld [vmem:[%s1 + $0x2c] sm:$0xf]
  %v53 = vld [vmem:[%s1 + $0x30] sm:$0xf]
  %v54 = vld [vmem:[%s1 + $0x34] sm:$0xf]
  %v55 = vld [vmem:[%s1 + $0x38] sm:$0xf]
  %v56 = vld [vmem:[%s1 + $0x3c] sm:$0xf]
  %v57 = vld [vmem:[%s2] sm:$0x1]
  %v59 = vlaneseq
  %v60 = vshrl.u32 %v59, 7
  %v61 = vsub.s32 0, %v60
  %v62 = vrot.slane %v57, %v61
  %v66 = vunpack.c.l.b16 %v39
  %v67 = vunpack.c.l.b16 %v40
  %v68 = vpack.c.b16 %v67, %v66
  %v86 = vunpack.c.l.b16 %v41
  %v87 = vunpack.c.l.b16 %v42
  %v88 = vunpack.c.l.b16 %v43
  %v89 = vunpack.c.l.b16 %v44
  %v90 = vunpack.c.l.b16 %v45
  %v91 = vunpack.c.l.b16 %v46
  %v92 = vunpack.c.l.b16 %v47
  %v93 = vunpack.c.l.b16 %v48
  %v94 = vunpack.c.l.b16 %v49
  %v95 = vunpack.c.l.b16 %v50
  %v96 = vunpack.c.l.b16 %v51
  %v97 = vunpack.c.l.b16 %v52
  %v98 = vunpack.c.l.b16 %v53
  %v99 = vunpack.c.l.b16 %v54
  %v100 = vunpack.c.l.b16 %v55
  %v101 = vunpack.c.l.b16 %v56
  %v102 = vpack.c.b16 %v87, %v86
  %v103 = vpack.c.b16 %v89, %v88
  %v104 = vpack.c.b16 %v91, %v90
  %v105 = vpack.c.b16 %v93, %v92
  %v106 = vpack.c.b16 %v95, %v94
  %v107 = vpack.c.b16 %v97, %v96
  %v108 = vpack.c.b16 %v99, %v98
  %v109 = vpack.c.b16 %v101, %v100
  %118 = vmatprep.subr.bf16.mxu0 0
  %119 = vmatpush1.bf16.msra.mxu0 %v102
  %120 = vmatprep.subr.bf16.mxu0 0
  %121 = vmatpush1.bf16.msra.mxu0 %v103
  %122 = vmatprep.subr.bf16.mxu0 0
  %123 = vmatpush1.bf16.msra.mxu0 %v104
  %124 = vmatprep.subr.bf16.mxu0 0
  %125 = vmatpush1.bf16.msra.mxu0 %v105
  %126 = vmatprep.subr.bf16.mxu0 0
  %127 = vmatpush1.bf16.msra.mxu0 %v106
  %128 = vmatprep.subr.bf16.mxu0 0
  %129 = vmatpush1.bf16.msra.mxu0 %v107
  %130 = vmatprep.subr.bf16.mxu0 0
  %131 = vmatpush1.bf16.msra.mxu0 %v108
  %132 = vmatprep.subr.bf16.mxu0 0
  %133 = vmatpush1.bf16.msra.mxu0 %v109
  %134 = vmatprep.subr.bf16.mxu0 0
  %135 = vmatpush1.bf16.msra.mxu0 0
  %136 = vmatprep.subr.bf16.mxu0 0
  %137 = vmatpush1.bf16.msra.mxu0 0
  %138 = vmatprep.subr.bf16.mxu0 0
  %139 = vmatpush1.bf16.msra.mxu0 0
  %140 = vmatprep.subr.bf16.mxu0 0
  %141 = vmatpush1.bf16.msra.mxu0 0
  %142 = vmatprep.subr.bf16.mxu0 0
  %143 = vmatpush1.bf16.msra.mxu0 0
  %144 = vmatprep.subr.bf16.mxu0 0
  %145 = vmatpush1.bf16.msra.mxu0 0
  %146 = vmatprep.subr.bf16.mxu0 0
  %147 = vmatpush1.bf16.msra.mxu0 0
  %148 = vmatprep.subr.bf16.mxu0 0
  %149 = vmatpush1.bf16.msra.mxu0 0
  %150 = vmatprep.mubr.bf16.mxu0 0
  %151 = vmatmul.mubr.bf16.gmra.mrb[0].mxu0 %v68
  %v152 = vpop.f32.mrb[0].mxu0
  %v153 = vadd.f32 %v62, %v152
  %v154 = vpop.f32.mrb[0].mxu0
  %v155 = vpop.f32.mrb[0].mxu0
  %v156 = vadd.f32 %v62, %v155
  %v157 = vpop.f32.mrb[0].mxu0
  %158 = vdwg.mxu0
  %v159 = vmax.f32 %v153, 0.0
  %v160 = vmax.f32 %v156, 0.0
  %v161 = vpack.c.bf16 %v160, %v159
  %v162 = vld [vmem:[%s3] sm:$0xf]
  %v163 = vld [vmem:[%s3 + $0x4] sm:$0xf]
  %v164 = vld [vmem:[%s3 + $0x8] sm:$0xf]
  %v165 = vld [vmem:[%s3 + $0xc] sm:$0xf]
  %v166 = vld [vmem:[%s3 + $0x10] sm:$0xf]
  %v167 = vld [vmem:[%s3 + $0x14] sm:$0xf]
  %v168 = vld [vmem:[%s3 + $0x18] sm:$0xf]
  %v169 = vld [vmem:[%s3 + $0x1c] sm:$0xf]
  %v170 = vld [vmem:[%s3 + $0x20] sm:$0xf]
  %v171 = vld [vmem:[%s3 + $0x24] sm:$0xf]
  %v172 = vld [vmem:[%s3 + $0x28] sm:$0xf]
  %v173 = vld [vmem:[%s3 + $0x2c] sm:$0xf]
  %v174 = vld [vmem:[%s3 + $0x30] sm:$0xf]
  %v175 = vld [vmem:[%s3 + $0x34] sm:$0xf]
  %v176 = vld [vmem:[%s3 + $0x38] sm:$0xf]
  %v177 = vld [vmem:[%s3 + $0x3c] sm:$0xf]
  %v178 = vld [vmem:[%s4] sm:$0x1]
  %v180 = vlaneseq
  %v181 = vshrl.u32 %v180, 7
  %v182 = vsub.s32 0, %v181
  %v183 = vrot.slane %v178, %v182
  %v201 = vunpack.c.l.b16 %v162
  %v202 = vunpack.c.l.b16 %v163
  %v203 = vunpack.c.l.b16 %v164
  %v204 = vunpack.c.l.b16 %v165
  %v205 = vunpack.c.l.b16 %v166
  %v206 = vunpack.c.l.b16 %v167
  %v207 = vunpack.c.l.b16 %v168
  %v208 = vunpack.c.l.b16 %v169
  %v209 = vunpack.c.l.b16 %v170
  %v210 = vunpack.c.l.b16 %v171
  %v211 = vunpack.c.l.b16 %v172
  %v212 = vunpack.c.l.b16 %v173
  %v213 = vunpack.c.l.b16 %v174
  %v214 = vunpack.c.l.b16 %v175
  %v215 = vunpack.c.l.b16 %v176
  %v216 = vunpack.c.l.b16 %v177
  %v217 = vpack.c.b16 %v202, %v201
  %v218 = vpack.c.b16 %v204, %v203
  %v219 = vpack.c.b16 %v206, %v205
  %v220 = vpack.c.b16 %v208, %v207
  %v221 = vpack.c.b16 %v210, %v209
  %v222 = vpack.c.b16 %v212, %v211
  %v223 = vpack.c.b16 %v214, %v213
  %v224 = vpack.c.b16 %v216, %v215
  %233 = vmatprep.subr.bf16.mxu0 0
  %234 = vmatpush1.bf16.msra.mxu0 %v217
  %235 = vmatprep.subr.bf16.mxu0 0
  %236 = vmatpush1.bf16.msra.mxu0 %v218
  %237 = vmatprep.subr.bf16.mxu0 0
  %238 = vmatpush1.bf16.msra.mxu0 %v219
  %239 = vmatprep.subr.bf16.mxu0 0
  %240 = vmatpush1.bf16.msra.mxu0 %v220
  %241 = vmatprep.subr.bf16.mxu0 0
  %242 = vmatpush1.bf16.msra.mxu0 %v221
  %243 = vmatprep.subr.bf16.mxu0 0
  %244 = vmatpush1.bf16.msra.mxu0 %v222
  %245 = vmatprep.subr.bf16.mxu0 0
  %246 = vmatpush1.bf16.msra.mxu0 %v223
  %247 = vmatprep.subr.bf16.mxu0 0
  %248 = vmatpush1.bf16.msra.mxu0 %v224
  %249 = vmatprep.subr.bf16.mxu0 0
  %250 = vmatpush1.bf16.msra.mxu0 0
  %251 = vmatprep.subr.bf16.mxu0 0
  %252 = vmatpush1.bf16.msra.mxu0 0
  %253 = vmatprep.subr.bf16.mxu0 0
  %254 = vmatpush1.bf16.msra.mxu0 0
  %255 = vmatprep.subr.bf16.mxu0 0
  %256 = vmatpush1.bf16.msra.mxu0 0
  %257 = vmatprep.subr.bf16.mxu0 0
  %258 = vmatpush1.bf16.msra.mxu0 0
  %259 = vmatprep.subr.bf16.mxu0 0
  %260 = vmatpush1.bf16.msra.mxu0 0
  %261 = vmatprep.subr.bf16.mxu0 0
  %262 = vmatpush1.bf16.msra.mxu0 0
  %263 = vmatprep.subr.bf16.mxu0 0
  %264 = vmatpush1.bf16.msra.mxu0 0
  %265 = vmatprep.mubr.bf16.mxu0 0
  %266 = vmatmul.mubr.bf16.gmra.mrb[0].mxu0 %v161
  %v267 = vpop.f32.mrb[0].mxu0
  %v268 = vadd.f32 %v183, %v267
  %v269 = vpop.f32.mrb[0].mxu0
  %v270 = vpop.f32.mrb[0].mxu0
  %v271 = vadd.f32 %v183, %v270
  %v272 = vpop.f32.mrb[0].mxu0
  %273 = vdwg.mxu0
  %v274 = vmax.f32 %v268, 0.0
  %v275 = vmax.f32 %v271, 0.0
  %v276 = vpack.c.bf16 %v275, %v274
  %v277 = vld [vmem:[%s5] sm:$0xf]
  %v278 = vld [vmem:[%s5 + $0x4] sm:$0xf]
  %v279 = vld [vmem:[%s5 + $0x8] sm:$0xf]
  %v280 = vld [vmem:[%s5 + $0xc] sm:$0xf]
  %v281 = vld [vmem:[%s5 + $0x10] sm:$0xf]
  %v282 = vld [vmem:[%s5 + $0x14] sm:$0xf]
  %v283 = vld [vmem:[%s5 + $0x18] sm:$0xf]
  %v284 = vld [vmem:[%s5 + $0x1c] sm:$0xf]
  %v285 = vld [vmem:[%s5 + $0x20] sm:$0xf]
  %v286 = vld [vmem:[%s5 + $0x24] sm:$0xf]
  %v287 = vld [vmem:[%s5 + $0x28] sm:$0xf]
  %v288 = vld [vmem:[%s5 + $0x2c] sm:$0xf]
  %v289 = vld [vmem:[%s5 + $0x30] sm:$0xf]
  %v290 = vld [vmem:[%s5 + $0x34] sm:$0xf]
  %v291 = vld [vmem:[%s5 + $0x38] sm:$0xf]
  %v292 = vld [vmem:[%s5 + $0x3c] sm:$0xf]
  %v293 = vld [vmem:[%s6] sm:$0x1]
  %v295 = vlaneseq
  %v296 = vshrl.u32 %v295, 7
  %v297 = vsub.s32 0, %v296
  %v298 = vrot.slane %v293, %v297
  %v316 = vunpack.c.l.b16 %v277
  %v317 = vunpack.c.l.b16 %v278
  %v318 = vunpack.c.l.b16 %v279
  %v319 = vunpack.c.l.b16 %v280
  %v320 = vunpack.c.l.b16 %v281
  %v321 = vunpack.c.l.b16 %v282
  %v322 = vunpack.c.l.b16 %v283
  %v323 = vunpack.c.l.b16 %v284
  %v324 = vunpack.c.l.b16 %v285
  %v325 = vunpack.c.l.b16 %v286
  %v326 = vunpack.c.l.b16 %v287
  %v327 = vunpack.c.l.b16 %v288
  %v328 = vunpack.c.l.b16 %v289
  %v329 = vunpack.c.l.b16 %v290
  %v330 = vunpack.c.l.b16 %v291
  %v331 = vunpack.c.l.b16 %v292
  %v332 = vpack.c.b16 %v317, %v316
  %v333 = vpack.c.b16 %v319, %v318
  %v334 = vpack.c.b16 %v321, %v320
  %v335 = vpack.c.b16 %v323, %v322
  %v336 = vpack.c.b16 %v325, %v324
  %v337 = vpack.c.b16 %v327, %v326
  %v338 = vpack.c.b16 %v329, %v328
  %v339 = vpack.c.b16 %v331, %v330
  %348 = vmatprep.subr.bf16.mxu0 0
  %349 = vmatpush1.bf16.msra.mxu0 %v332
  %350 = vmatprep.subr.bf16.mxu0 0
  %351 = vmatpush1.bf16.msra.mxu0 %v333
  %352 = vmatprep.subr.bf16.mxu0 0
  %353 = vmatpush1.bf16.msra.mxu0 %v334
  %354 = vmatprep.subr.bf16.mxu0 0
  %355 = vmatpush1.bf16.msra.mxu0 %v335
  %356 = vmatprep.subr.bf16.mxu0 0
  %357 = vmatpush1.bf16.msra.mxu0 %v336
  %358 = vmatprep.subr.bf16.mxu0 0
  %359 = vmatpush1.bf16.msra.mxu0 %v337
  %360 = vmatprep.subr.bf16.mxu0 0
  %361 = vmatpush1.bf16.msra.mxu0 %v338
  %362 = vmatprep.subr.bf16.mxu0 0
  %363 = vmatpush1.bf16.msra.mxu0 %v339
  %364 = vmatprep.subr.bf16.mxu0 0
  %365 = vmatpush1.bf16.msra.mxu0 0
  %366 = vmatprep.subr.bf16.mxu0 0
  %367 = vmatpush1.bf16.msra.mxu0 0
  %368 = vmatprep.subr.bf16.mxu0 0
  %369 = vmatpush1.bf16.msra.mxu0 0
  %370 = vmatprep.subr.bf16.mxu0 0
  %371 = vmatpush1.bf16.msra.mxu0 0
  %372 = vmatprep.subr.bf16.mxu0 0
  %373 = vmatpush1.bf16.msra.mxu0 0
  %374 = vmatprep.subr.bf16.mxu0 0
  %375 = vmatpush1.bf16.msra.mxu0 0
  %376 = vmatprep.subr.bf16.mxu0 0
  %377 = vmatpush1.bf16.msra.mxu0 0
  %378 = vmatprep.subr.bf16.mxu0 0
  %379 = vmatpush1.bf16.msra.mxu0 0
  %380 = vmatprep.mubr.bf16.mxu0 0
  %381 = vmatmul.mubr.bf16.gmra.mrb[0].mxu0 %v276
  %v382 = vpop.f32.mrb[0].mxu0
  %v383 = vadd.f32 %v298, %v382
  %v384 = vpop.f32.mrb[0].mxu0
  %v385 = vpop.f32.mrb[0].mxu0
  %v386 = vadd.f32 %v298, %v385
  %v387 = vpop.f32.mrb[0].mxu0
  %388 = vdwg.mxu0
  %v389 = vmax.f32 %v383, 0.0
  %v390 = vmax.f32 %v386, 0.0
  %v391 = vpack.c.bf16 %v390, %v389
  %v392 = vld [vmem:[%s7] sm:$0xf]
  %v393 = vld [vmem:[%s7 + $0x4] sm:$0xf]
  %v394 = vld [vmem:[%s7 + $0x8] sm:$0xf]
  %v395 = vld [vmem:[%s7 + $0xc] sm:$0xf]
  %v396 = vld [vmem:[%s7 + $0x10] sm:$0xf]
  %v397 = vld [vmem:[%s7 + $0x14] sm:$0xf]
  %v398 = vld [vmem:[%s7 + $0x18] sm:$0xf]
  %v399 = vld [vmem:[%s7 + $0x1c] sm:$0xf]
  %v400 = vld [vmem:[%s7 + $0x20] sm:$0xf]
  %v401 = vld [vmem:[%s7 + $0x24] sm:$0xf]
  %v402 = vld [vmem:[%s7 + $0x28] sm:$0xf]
  %v403 = vld [vmem:[%s7 + $0x2c] sm:$0xf]
  %v404 = vld [vmem:[%s7 + $0x30] sm:$0xf]
  %v405 = vld [vmem:[%s7 + $0x34] sm:$0xf]
  %v406 = vld [vmem:[%s7 + $0x38] sm:$0xf]
  %v407 = vld [vmem:[%s7 + $0x3c] sm:$0xf]
  %v408 = vld [vmem:[%s8] sm:$0x1]
  %v410 = vlaneseq
  %v411 = vshrl.u32 %v410, 7
  %v412 = vsub.s32 0, %v411
  %v413 = vrot.slane %v408, %v412
  %v431 = vunpack.c.l.b16 %v392
  %v432 = vunpack.c.l.b16 %v393
  %v433 = vunpack.c.l.b16 %v394
  %v434 = vunpack.c.l.b16 %v395
  %v435 = vunpack.c.l.b16 %v396
  %v436 = vunpack.c.l.b16 %v397
  %v437 = vunpack.c.l.b16 %v398
  %v438 = vunpack.c.l.b16 %v399
  %v439 = vunpack.c.l.b16 %v400
  %v440 = vunpack.c.l.b16 %v401
  %v441 = vunpack.c.l.b16 %v402
  %v442 = vunpack.c.l.b16 %v403
  %v443 = vunpack.c.l.b16 %v404
  %v444 = vunpack.c.l.b16 %v405
  %v445 = vunpack.c.l.b16 %v406
  %v446 = vunpack.c.l.b16 %v407
  %v447 = vpack.c.b16 %v432, %v431
  %v448 = vpack.c.b16 %v434, %v433
  %v449 = vpack.c.b16 %v436, %v435
  %v450 = vpack.c.b16 %v438, %v437
  %v451 = vpack.c.b16 %v440, %v439
  %v452 = vpack.c.b16 %v442, %v441
  %v453 = vpack.c.b16 %v444, %v443
  %v454 = vpack.c.b16 %v446, %v445
  %463 = vmatprep.subr.bf16.mxu0 0
  %464 = vmatpush1.bf16.msra.mxu0 %v447
  %465 = vmatprep.subr.bf16.mxu0 0
  %466 = vmatpush1.bf16.msra.mxu0 %v448
  %467 = vmatprep.subr.bf16.mxu0 0
  %468 = vmatpush1.bf16.msra.mxu0 %v449
  %469 = vmatprep.subr.bf16.mxu0 0
  %470 = vmatpush1.bf16.msra.mxu0 %v450
  %471 = vmatprep.subr.bf16.mxu0 0
  %472 = vmatpush1.bf16.msra.mxu0 %v451
  %473 = vmatprep.subr.bf16.mxu0 0
  %474 = vmatpush1.bf16.msra.mxu0 %v452
  %475 = vmatprep.subr.bf16.mxu0 0
  %476 = vmatpush1.bf16.msra.mxu0 %v453
  %477 = vmatprep.subr.bf16.mxu0 0
  %478 = vmatpush1.bf16.msra.mxu0 %v454
  %479 = vmatprep.subr.bf16.mxu0 0
  %480 = vmatpush1.bf16.msra.mxu0 0
  %481 = vmatprep.subr.bf16.mxu0 0
  %482 = vmatpush1.bf16.msra.mxu0 0
  %483 = vmatprep.subr.bf16.mxu0 0
  %484 = vmatpush1.bf16.msra.mxu0 0
  %485 = vmatprep.subr.bf16.mxu0 0
  %486 = vmatpush1.bf16.msra.mxu0 0
  %487 = vmatprep.subr.bf16.mxu0 0
  %488 = vmatpush1.bf16.msra.mxu0 0
  %489 = vmatprep.subr.bf16.mxu0 0
  %490 = vmatpush1.bf16.msra.mxu0 0
  %491 = vmatprep.subr.bf16.mxu0 0
  %492 = vmatpush1.bf16.msra.mxu0 0
  %493 = vmatprep.subr.bf16.mxu0 0
  %494 = vmatpush1.bf16.msra.mxu0 0
  %495 = vmatprep.mubr.bf16.mxu0 0
  %496 = vmatmul.mubr.bf16.gmra.mrb[0].mxu0 %v391
  %v497 = vpop.f32.mrb[0].mxu0
  %v498 = vadd.f32 %v413, %v497
  %v499 = vpop.f32.mrb[0].mxu0
  %v500 = vpop.f32.mrb[0].mxu0
  %v501 = vadd.f32 %v413, %v500
  %v502 = vpop.f32.mrb[0].mxu0
  %503 = vdwg.mxu0
  %v504 = vmax.f32 %v498, 0.0
  %v505 = vmax.f32 %v501, 0.0
  %v506 = vpack.c.bf16 %v505, %v504
  %v507 = vld [vmem:[%s9] sm:$0xf]
  %v508 = vld [vmem:[%s9 + $0x4] sm:$0xf]
  %v509 = vld [vmem:[%s9 + $0x8] sm:$0xf]
  %v510 = vld [vmem:[%s9 + $0xc] sm:$0xf]
  %v511 = vld [vmem:[%s9 + $0x10] sm:$0xf]
  %v512 = vld [vmem:[%s9 + $0x14] sm:$0xf]
  %v513 = vld [vmem:[%s9 + $0x18] sm:$0xf]
  %v514 = vld [vmem:[%s9 + $0x1c] sm:$0xf]
  %v515 = vld [vmem:[%s9 + $0x20] sm:$0xf]
  %v516 = vld [vmem:[%s9 + $0x24] sm:$0xf]
  %v517 = vld [vmem:[%s9 + $0x28] sm:$0xf]
  %v518 = vld [vmem:[%s9 + $0x2c] sm:$0xf]
  %v519 = vld [vmem:[%s9 + $0x30] sm:$0xf]
  %v520 = vld [vmem:[%s9 + $0x34] sm:$0xf]
  %v521 = vld [vmem:[%s9 + $0x38] sm:$0xf]
  %v522 = vld [vmem:[%s9 + $0x3c] sm:$0xf]
  %v523 = vld [vmem:[%s10] sm:$0x1]
  %v525 = vlaneseq
  %v526 = vshrl.u32 %v525, 7
  %v527 = vsub.s32 0, %v526
  %v528 = vrot.slane %v523, %v527
  %v546 = vunpack.c.l.b16 %v507
  %v547 = vunpack.c.l.b16 %v508
  %v548 = vunpack.c.l.b16 %v509
  %v549 = vunpack.c.l.b16 %v510
  %v550 = vunpack.c.l.b16 %v511
  %v551 = vunpack.c.l.b16 %v512
  %v552 = vunpack.c.l.b16 %v513
  %v553 = vunpack.c.l.b16 %v514
  %v554 = vunpack.c.l.b16 %v515
  %v555 = vunpack.c.l.b16 %v516
  %v556 = vunpack.c.l.b16 %v517
  %v557 = vunpack.c.l.b16 %v518
  %v558 = vunpack.c.l.b16 %v519
  %v559 = vunpack.c.l.b16 %v520
  %v560 = vunpack.c.l.b16 %v521
  %v561 = vunpack.c.l.b16 %v522
  %v562 = vpack.c.b16 %v547, %v546
  %v563 = vpack.c.b16 %v549, %v548
  %v564 = vpack.c.b16 %v551, %v550
  %v565 = vpack.c.b16 %v553, %v552
  %v566 = vpack.c.b16 %v555, %v554
  %v567 = vpack.c.b16 %v557, %v556
  %v568 = vpack.c.b16 %v559, %v558
  %v569 = vpack.c.b16 %v561, %v560
  %578 = vmatprep.subr.bf16.mxu0 0
  %579 = vmatpush1.bf16.msra.mxu0 %v562
  %580 = vmatprep.subr.bf16.mxu0 0
  %581 = vmatpush1.bf16.msra.mxu0 %v563
  %582 = vmatprep.subr.bf16.mxu0 0
  %583 = vmatpush1.bf16.msra.mxu0 %v564
  %584 = vmatprep.subr.bf16.mxu0 0
  %585 = vmatpush1.bf16.msra.mxu0 %v565
  %586 = vmatprep.subr.bf16.mxu0 0
  %587 = vmatpush1.bf16.msra.mxu0 %v566
  %588 = vmatprep.subr.bf16.mxu0 0
  %589 = vmatpush1.bf16.msra.mxu0 %v567
  %590 = vmatprep.subr.bf16.mxu0 0
  %591 = vmatpush1.bf16.msra.mxu0 %v568
  %592 = vmatprep.subr.bf16.mxu0 0
  %593 = vmatpush1.bf16.msra.mxu0 %v569
  %594 = vmatprep.subr.bf16.mxu0 0
  %595 = vmatpush1.bf16.msra.mxu0 0
  %596 = vmatprep.subr.bf16.mxu0 0
  %597 = vmatpush1.bf16.msra.mxu0 0
  %598 = vmatprep.subr.bf16.mxu0 0
  %599 = vmatpush1.bf16.msra.mxu0 0
  %600 = vmatprep.subr.bf16.mxu0 0
  %601 = vmatpush1.bf16.msra.mxu0 0
  %602 = vmatprep.subr.bf16.mxu0 0
  %603 = vmatpush1.bf16.msra.mxu0 0
  %604 = vmatprep.subr.bf16.mxu0 0
  %605 = vmatpush1.bf16.msra.mxu0 0
  %606 = vmatprep.subr.bf16.mxu0 0
  %607 = vmatpush1.bf16.msra.mxu0 0
  %608 = vmatprep.subr.bf16.mxu0 0
  %609 = vmatpush1.bf16.msra.mxu0 0
  %610 = vmatprep.mubr.bf16.mxu0 0
  %611 = vmatmul.mubr.bf16.gmra.mrb[0].mxu0 %v506
  %v612 = vpop.f32.mrb[0].mxu0
  %v613 = vadd.f32 %v528, %v612
  %v614 = vpop.f32.mrb[0].mxu0
  %v615 = vpop.f32.mrb[0].mxu0
  %v616 = vadd.f32 %v528, %v615
  %v617 = vpop.f32.mrb[0].mxu0
  %618 = vdwg.mxu0
  %619 = vst [vmem:[%s11] sm:$0xff] %v613
  %620 = vst [vmem:[%s11 + $0x8] sm:$0xff] %v616
  // Predicated region
  $region46: #{mlp_forward.1} parent=0 // pred_check
    _
  $region47: #{mlp_forward.1} parent=0 // pred_check_branch
    %622 = sbr.rel (0) target = $region49
  $region48: #{mlp_forward.1} parent=0 // pred_region
    _
  $region49: #{mlp_forward.1} parent=0 // pred_fallthru
    _
  // Predicated region
  $region50: #{mlp_forward.1} parent=0 // pred_check
    _
  $region51: #{mlp_forward.1} parent=0 // pred_check_branch
    %624 = sbr.rel (0) target = $region53
  $region52: #{mlp_forward.1} parent=0 // pred_region
    _
  $region53: #{mlp_forward.1} parent=0 // pred_fallthru
    _

</llo_original>
